<compile_context>
chip_gen: v7x
topology: tpu7x:2x2x1
jax: 0.10.0
libtpu: 0.0.40
codegen_flags: <defaults>
</compile_context>

<pallas_src>
import functools

import jax
import jax.numpy as jnp
from jax.experimental import pallas as pl
from jax.experimental.pallas import tpu as pltpu


def _round_up(n, m):
    return ((n + m - 1) // m) * m


def _cdiv(a, b):
    return -(-a // b)


def _pad2(a, rows, cols):
    return jnp.pad(a, ((0, rows - a.shape[0]), (0, cols - a.shape[1])))


def _nbeats_kernel(num_layers, *refs):
    """refs = x, (w_i, b_i) * num_layers, (w_heads, b_heads), out."""
    x_ref = refs[0]
    out_ref = refs[-1]

    h = x_ref[...].astype(jnp.bfloat16)   # x may arrive f32; cast in-kernel
    idx = 1
    for _ in range(num_layers):
        w = refs[idx][...]                # bf16 (K, N), VMEM-resident
        b = refs[idx + 1][...]            # f32  (1, N)
        idx += 2
        acc = jnp.dot(h, w, preferred_element_type=jnp.float32) + b
        acc = jnp.maximum(acc, 0.0)       # relu; Dropout(p=0)+relu is identity
        h = acc.astype(jnp.bfloat16)      # bf16 LHS for next MXU pass

    w_heads = refs[idx][...]              # bf16 (hid_pad, heads_pad)
    b_heads = refs[idx + 1][...]          # f32  (1, heads_pad)
    out = jnp.dot(h, w_heads, preferred_element_type=jnp.float32) + b_heads
    out_ref[...] = out.astype(out_ref.dtype)


def prepare_nbeats_params(stack_params, back_params, fore_params):
    """Pad + cast parameters once (call this outside the hot path).

    stack_params: list of (W (in,out), b (1,out)) f32; back/fore_params likewise.
    Zero-padding is exact: padded input lanes / weight rows / bias lanes are 0,
    so padded hidden lanes stay 0 through ReLU and contribute nothing.
    """
    num_layers = len(stack_params)
    input_size = stack_params[0][0].shape[0]
    hidden_size = stack_params[0][0].shape[1]
    output_size = fore_params[0].shape[1]

    in_pad = _round_up(input_size, 128)
    hid_pad = _round_up(hidden_size, 128)

    params = []
    prev_pad = in_pad
    for w, b in stack_params:
        params.append((_pad2(w, prev_pad, hid_pad).astype(jnp.bfloat16),
                       _pad2(b, 1, hid_pad).astype(jnp.float32)))
        prev_pad = hid_pad

    # Fuse the two heads into one lane-dense matmul.  If the forecast columns
    # fit in the backcast block's 128-lane padding tail, pack them there.
    packed_heads = (in_pad - input_size) >= output_size
    if packed_heads:
        heads_pad = in_pad
        fore_off = input_size
        w_h = jnp.zeros((hid_pad, heads_pad), jnp.float32)
        w_h = w_h.at[:hidden_size, :input_size].set(back_params[0])
        w_h = w_h.at[:hidden_size, fore_off:fore_off + output_size].set(fore_params[0])
        b_h = jnp.zeros((1, heads_pad), jnp.float32)
        b_h = b_h.at[:, :input_size].set(back_params[1])
        b_h = b_h.at[:, fore_off:fore_off + output_size].set(fore_params[1])
    else:
        out_pad = _round_up(output_size, 128)
        heads_pad = in_pad + out_pad
        fore_off = in_pad
        w_h = jnp.concatenate([_pad2(back_params[0], hid_pad, in_pad),
                               _pad2(fore_params[0], hid_pad, out_pad)], axis=1)
        b_h = jnp.concatenate([_pad2(back_params[1], 1, in_pad),
                               _pad2(fore_params[1], 1, out_pad)], axis=1)
    params.append((w_h.astype(jnp.bfloat16), b_h.astype(jnp.float32)))

    return dict(params=params, num_layers=num_layers,
                input_size=input_size, hidden_size=hidden_size,
                output_size=output_size, in_pad=in_pad, hid_pad=hid_pad,
                heads_pad=heads_pad, fore_off=fore_off)


def _choose_tile_b(batch):
    """16-aligned (bf16 sublane packing) batch tile, <=512, >=2 grid steps
    when the batch allows (v7x megacore), minimal last-tile padding."""
    b16 = _round_up(batch, 16)
    if b16 <= 16:
        return b16
    n_tiles = max(2, _cdiv(b16, 512))
    return _round_up(_cdiv(batch, n_tiles), 16)


def _vmem_cap_bytes():
    """75% of physical VMEM (headroom for Mosaic scratch): ~48 MiB on v7x,
    ~96 MiB on v5e/v6e.  Conservative fallback if the query is unavailable."""
    try:
        cap = int(pltpu.get_tpu_info().vmem_capacity_bytes)
    except Exception:  # noqa: BLE001 - fall back to the smallest generation
        cap = 64 * 1024 * 1024
    return (cap * 3) // 4


def nbeats_block_forward(x, prepared, tile_b=None, out_dtype=jnp.bfloat16):
    """x: (batch, input_size) f32.  prepared: output of prepare_nbeats_params."""
    num_layers = prepared["num_layers"]
    input_size = prepared["input_size"]
    output_size = prepared["output_size"]
    in_pad = prepared["in_pad"]
    hid_pad = prepared["hid_pad"]
    heads_pad = prepared["heads_pad"]
    fore_off = prepared["fore_off"]

    batch = x.shape[0]
    assert x.shape[1] == input_size

    if tile_b is None:
        tile_b = _choose_tile_b(batch)
    tile_b = _round_up(tile_b, 16)
    batch_pad = _round_up(batch, tile_b)
    grid = (batch_pad // tile_b,)

    # Feed x as f32 and cast in-kernel when no padding is required (saves a
    # wrapper pass); otherwise pad + cast to bf16 once in the wrapper.
    if batch == batch_pad and input_size == in_pad:
        x_p = x
    else:
        x_p = _pad2(x, batch_pad, in_pad).astype(jnp.bfloat16)

    flat_args = [x_p]
    in_specs = [pl.BlockSpec((tile_b, in_pad), lambda i: (i, 0))]
    resident = pl.Buffered(1)  # constant index_map -> single-buffer, stays resident
    for w, b in prepared["params"]:
        flat_args.extend([w, b])
        in_specs.append(pl.BlockSpec(w.shape, lambda i: (0, 0), pipeline_mode=resident))
        in_specs.append(pl.BlockSpec(b.shape, lambda i: (0, 0), pipeline_mode=resident))

    out_spec = pl.BlockSpec((tile_b, heads_pad), lambda i: (i, 0))
    out_shape = jax.ShapeDtypeStruct((batch_pad, heads_pad), out_dtype)

    # Cost / VMEM bookkeeping.
    flops = 2 * batch_pad * in_pad * hid_pad
    flops += 2 * batch_pad * hid_pad * hid_pad * (num_layers - 1)
    flops += 2 * batch_pad * hid_pad * heads_pad
    weight_bytes = sum(int(a.size) * a.dtype.itemsize for a in flat_args[1:])
    x_item = x_p.dtype.itemsize
    out_item = jnp.dtype(out_dtype).itemsize
    io_bytes = int(x_p.size) * x_item + batch_pad * heads_pad * out_item
    vmem_need = (weight_bytes                                    # 1x: Buffered(1) weights
                 + 2 * tile_b * in_pad * x_item                  # double-buffered x tile
                 + 2 * tile_b * heads_pad * out_item             # double-buffered out tile
                 + tile_b * max(hid_pad, heads_pad) * 8)         # live f32+bf16 activations
    vmem_limit = int(min(max(int(vmem_need * 1.25), 32 * 1024 * 1024), _vmem_cap_bytes()))

    kernel = functools.partial(_nbeats_kernel, num_layers)
    out = pl.pallas_call(
        kernel,
        grid=grid,
        in_specs=in_specs,
        out_specs=out_spec,
        out_shape=out_shape,
        compiler_params=pltpu.CompilerParams(
            dimension_semantics=("parallel",),
            vmem_limit_bytes=vmem_limit),
        cost_estimate=pl.CostEstimate(
            flops=flops, transcendentals=0,
            bytes_accessed=weight_bytes + io_bytes),
    )(*flat_args)

    backcast = out[:batch, :input_size].astype(x.dtype)
    forecast = out[:batch, fore_off:fore_off + output_size].astype(x.dtype)
    return backcast, forecast


def _init_linear(key, fan_in, fan_out):
    """Deterministic init (uniform, PyTorch-Linear-style bound); W stored (in, out)."""
    kw, kb = jax.random.split(key)
    bound = 1.0 / jnp.sqrt(fan_in)
    w = jax.random.uniform(kw, (fan_in, fan_out), jnp.float32, -bound, bound)
    b = jax.random.uniform(kb, (1, fan_out), jnp.float32, -bound, bound)
    return w, b


def _reference_forward(x, stack_params, back_params, fore_params):
    """Pure-f32 reference matching the PyTorch module semantics."""
    h = x
    for w, b in stack_params:
        h = jnp.maximum(h @ w + b, 0.0)
    return h @ back_params[0] + back_params[1], h @ fore_params[0] + fore_params[1]


if __name__ == "__main__":
    batch = 8
    input_size = 32
    hidden_size = 64
    output_size = 16
    num_layers = 3

    key = jax.random.PRNGKey(0)
    keys = jax.random.split(key, num_layers + 3)

    stack_params = [_init_linear(keys[0], input_size, hidden_size)]
    for i in range(1, num_layers):
        stack_params.append(_init_linear(keys[i], hidden_size, hidden_size))
    back_params = _init_linear(keys[num_layers], hidden_size, input_size)
    fore_params = _init_linear(keys[num_layers + 1], hidden_size, output_size)

    x = jax.random.normal(keys[num_layers + 2], (batch, input_size), jnp.float32)

    # Pad/cast parameters once; repeated forward calls do no weight prep work.
    prepared = prepare_nbeats_params(stack_params, back_params, fore_params)

    backcast, forecast = nbeats_block_forward(x, prepared)
    jax.block_until_ready((backcast, forecast))

    ref_back, ref_fore = _reference_forward(x, stack_params, back_params, fore_params)
    assert backcast.shape == (batch, input_size)
    assert forecast.shape == (batch, output_size)
    # bf16 matmul inputs + bf16 output slab (f32 accumulation) vs pure-f32
    # reference -> looser tolerance.
    assert jnp.allclose(backcast, ref_back, atol=5e-2, rtol=5e-2)
    assert jnp.allclose(forecast, ref_fore, atol=5e-2, rtol=5e-2)

    print("KERNEL_OK")
</pallas_src>

<mosaic_0001>
module attributes {stable_mosaic.version = 11 : i64} {
  func.func @_nbeats_kernel(%arg0: i32, %arg1: memref<16x128xbf16, #tpu.memory_space<vmem>>, %arg2: memref<128x128xbf16, #tpu.memory_space<vmem>>, %arg3: memref<1x128xf32, #tpu.memory_space<vmem>>, %arg4: memref<128x128xbf16, #tpu.memory_space<vmem>>, %arg5: memref<1x128xf32, #tpu.memory_space<vmem>>, %arg6: memref<128x128xbf16, #tpu.memory_space<vmem>>, %arg7: memref<1x128xf32, #tpu.memory_space<vmem>>, %arg8: memref<128x128xbf16, #tpu.memory_space<vmem>>, %arg9: memref<1x128xf32, #tpu.memory_space<vmem>>, %arg10: memref<16x128xbf16, #tpu.memory_space<vmem>>) attributes {dimension_semantics = [#tpu.dimension_semantics<parallel>], iteration_bounds = array<i64: 1>, scalar_prefetch = 0 : i64, scratch_operands = 0 : i64, tpu.core_type = #tpu.core_type<tc>, window_params = [{transform_indices = @transform_0, window_bounds = array<i64: 16, 128>}, {pipeline_mode = #tpu.pipeline_mode<synchronous>, transform_indices = @transform_1, window_bounds = array<i64: 128, 128>}, {pipeline_mode = #tpu.pipeline_mode<synchronous>, transform_indices = @transform_2, window_bounds = array<i64: 1, 128>}, {pipeline_mode = #tpu.pipeline_mode<synchronous>, transform_indices = @transform_3, window_bounds = array<i64: 128, 128>}, {pipeline_mode = #tpu.pipeline_mode<synchronous>, transform_indices = @transform_4, window_bounds = array<i64: 1, 128>}, {pipeline_mode = #tpu.pipeline_mode<synchronous>, transform_indices = @transform_5, window_bounds = array<i64: 128, 128>}, {pipeline_mode = #tpu.pipeline_mode<synchronous>, transform_indices = @transform_6, window_bounds = array<i64: 1, 128>}, {pipeline_mode = #tpu.pipeline_mode<synchronous>, transform_indices = @transform_7, window_bounds = array<i64: 128, 128>}, {pipeline_mode = #tpu.pipeline_mode<synchronous>, transform_indices = @transform_8, window_bounds = array<i64: 1, 128>}, {transform_indices = @transform_9, window_bounds = array<i64: 16, 128>}]} {
    %c0 = arith.constant 0 : index
    %c0_0 = arith.constant 0 : index
    %0 = vector.load %arg1[%c0, %c0_0] : memref<16x128xbf16, #tpu.memory_space<vmem>>, vector<16x128xbf16>
    %c0_1 = arith.constant 0 : index
    %c0_2 = arith.constant 0 : index
    %1 = vector.load %arg2[%c0_1, %c0_2] : memref<128x128xbf16, #tpu.memory_space<vmem>>, vector<128x128xbf16>
    %c0_3 = arith.constant 0 : index
    %c0_4 = arith.constant 0 : index
    %2 = vector.load %arg3[%c0_3, %c0_4] : memref<1x128xf32, #tpu.memory_space<vmem>>, vector<1x128xf32>
    %cst = arith.constant dense<0.000000e+00> : vector<16x128xf32>
    %3 = tpu.matmul %0, %1, %cst {dimension_numbers = #tpu.dot_dimension_numbers<[1], [0], [0], [1], [0, 0, 1, 1], [], []>} : vector<16x128xbf16>, vector<128x128xbf16>, vector<16x128xf32> -> vector<16x128xf32>
    %4 = vector.broadcast %2 : vector<1x128xf32> to vector<16x128xf32>
    %5 = arith.addf %3, %4 : vector<16x128xf32>
    %cst_5 = arith.constant 0.000000e+00 : f32
    %6 = vector.broadcast %cst_5 : f32 to vector<16x128xf32>
    %7 = arith.maximumf %5, %6 : vector<16x128xf32>
    %8 = arith.truncf %7 : vector<16x128xf32> to vector<16x128xbf16>
    %c0_6 = arith.constant 0 : index
    %c0_7 = arith.constant 0 : index
    %9 = vector.load %arg4[%c0_6, %c0_7] : memref<128x128xbf16, #tpu.memory_space<vmem>>, vector<128x128xbf16>
    %c0_8 = arith.constant 0 : index
    %c0_9 = arith.constant 0 : index
    %10 = vector.load %arg5[%c0_8, %c0_9] : memref<1x128xf32, #tpu.memory_space<vmem>>, vector<1x128xf32>
    %cst_10 = arith.constant dense<0.000000e+00> : vector<16x128xf32>
    %11 = tpu.matmul %8, %9, %cst_10 {dimension_numbers = #tpu.dot_dimension_numbers<[1], [0], [0], [1], [0, 0, 1, 1], [], []>} : vector<16x128xbf16>, vector<128x128xbf16>, vector<16x128xf32> -> vector<16x128xf32>
    %12 = vector.broadcast %10 : vector<1x128xf32> to vector<16x128xf32>
    %13 = arith.addf %11, %12 : vector<16x128xf32>
    %cst_11 = arith.constant 0.000000e+00 : f32
    %14 = vector.broadcast %cst_11 : f32 to vector<16x128xf32>
    %15 = arith.maximumf %13, %14 : vector<16x128xf32>
    %16 = arith.truncf %15 : vector<16x128xf32> to vector<16x128xbf16>
    %c0_12 = arith.constant 0 : index
    %c0_13 = arith.constant 0 : index
    %17 = vector.load %arg6[%c0_12, %c0_13] : memref<128x128xbf16, #tpu.memory_space<vmem>>, vector<128x128xbf16>
    %c0_14 = arith.constant 0 : index
    %c0_15 = arith.constant 0 : index
    %18 = vector.load %arg7[%c0_14, %c0_15] : memref<1x128xf32, #tpu.memory_space<vmem>>, vector<1x128xf32>
    %cst_16 = arith.constant dense<0.000000e+00> : vector<16x128xf32>
    %19 = tpu.matmul %16, %17, %cst_16 {dimension_numbers = #tpu.dot_dimension_numbers<[1], [0], [0], [1], [0, 0, 1, 1], [], []>} : vector<16x128xbf16>, vector<128x128xbf16>, vector<16x128xf32> -> vector<16x128xf32>
    %20 = vector.broadcast %18 : vector<1x128xf32> to vector<16x128xf32>
    %21 = arith.addf %19, %20 : vector<16x128xf32>
    %cst_17 = arith.constant 0.000000e+00 : f32
    %22 = vector.broadcast %cst_17 : f32 to vector<16x128xf32>
    %23 = arith.maximumf %21, %22 : vector<16x128xf32>
    %24 = arith.truncf %23 : vector<16x128xf32> to vector<16x128xbf16>
    %c0_18 = arith.constant 0 : index
    %c0_19 = arith.constant 0 : index
    %25 = vector.load %arg8[%c0_18, %c0_19] : memref<128x128xbf16, #tpu.memory_space<vmem>>, vector<128x128xbf16>
    %c0_20 = arith.constant 0 : index
    %c0_21 = arith.constant 0 : index
    %26 = vector.load %arg9[%c0_20, %c0_21] : memref<1x128xf32, #tpu.memory_space<vmem>>, vector<1x128xf32>
    %cst_22 = arith.constant dense<0.000000e+00> : vector<16x128xf32>
    %27 = tpu.matmul %24, %25, %cst_22 {dimension_numbers = #tpu.dot_dimension_numbers<[1], [0], [0], [1], [0, 0, 1, 1], [], []>} : vector<16x128xbf16>, vector<128x128xbf16>, vector<16x128xf32> -> vector<16x128xf32>
    %28 = vector.broadcast %26 : vector<1x128xf32> to vector<16x128xf32>
    %29 = arith.addf %27, %28 : vector<16x128xf32>
    %30 = arith.truncf %29 : vector<16x128xf32> to vector<16x128xbf16>
    %c0_23 = arith.constant 0 : index
    %c0_24 = arith.constant 0 : index
    %31 = vector.load %arg10[%c0_23, %c0_24] : memref<16x128xbf16, #tpu.memory_space<vmem>>, vector<16x128xbf16>
    tpu.vector_store %arg10[%c0_23, %c0_24], %30 {strides = array<i32>} : memref<16x128xbf16, #tpu.memory_space<vmem>>, vector<16x128xbf16>,
    return
  }
  func.func @transform_0(%arg0: i32) -> (i32, i32) {
    %c0_i32 = arith.constant 0 : i32
    %c0_i32_0 = arith.constant 0 : i32
    return %arg0, %c0_i32 : i32, i32
  }
  func.func @transform_1(%arg0: i32) -> (i32, i32) {
    %c0_i32 = arith.constant 0 : i32
    %c0_i32_0 = arith.constant 0 : i32
    %c0_i32_1 = arith.constant 0 : i32
    return %c0_i32, %c0_i32_0 : i32, i32
  }
  func.func @transform_2(%arg0: i32) -> (i32, i32) {
    %c0_i32 = arith.constant 0 : i32
    %c0_i32_0 = arith.constant 0 : i32
    %c0_i32_1 = arith.constant 0 : i32
    return %c0_i32, %c0_i32_0 : i32, i32
  }
  func.func @transform_3(%arg0: i32) -> (i32, i32) {
    %c0_i32 = arith.constant 0 : i32
    %c0_i32_0 = arith.constant 0 : i32
    %c0_i32_1 = arith.constant 0 : i32
    return %c0_i32, %c0_i32_0 : i32, i32
  }
  func.func @transform_4(%arg0: i32) -> (i32, i32) {
    %c0_i32 = arith.constant 0 : i32
    %c0_i32_0 = arith.constant 0 : i32
    %c0_i32_1 = arith.constant 0 : i32
    return %c0_i32, %c0_i32_0 : i32, i32
  }
  func.func @transform_5(%arg0: i32) -> (i32, i32) {
    %c0_i32 = arith.constant 0 : i32
    %c0_i32_0 = arith.constant 0 : i32
    %c0_i32_1 = arith.constant 0 : i32
    return %c0_i32, %c0_i32_0 : i32, i32
  }
  func.func @transform_6(%arg0: i32) -> (i32, i32) {
    %c0_i32 = arith.constant 0 : i32
    %c0_i32_0 = arith.constant 0 : i32
    %c0_i32_1 = arith.constant 0 : i32
    return %c0_i32, %c0_i32_0 : i32, i32
  }
  func.func @transform_7(%arg0: i32) -> (i32, i32) {
    %c0_i32 = arith.constant 0 : i32
    %c0_i32_0 = arith.constant 0 : i32
    %c0_i32_1 = arith.constant 0 : i32
    return %c0_i32, %c0_i32_0 : i32, i32
  }
  func.func @transform_8(%arg0: i32) -> (i32, i32) {
    %c0_i32 = arith.constant 0 : i32
    %c0_i32_0 = arith.constant 0 : i32
    %c0_i32_1 = arith.constant 0 : i32
    return %c0_i32, %c0_i32_0 : i32, i32
  }
  func.func @transform_9(%arg0: i32) -> (i32, i32) {
    %c0_i32 = arith.constant 0 : i32
    %c0_i32_0 = arith.constant 0 : i32
    return %arg0, %c0_i32 : i32, i32
  }
}

</mosaic_0001>

<llo_original>
// kernel: tpu_custom_call.1
$region0: #{tpu_custom_call.1}
  #allocation0 [shape = 'u32[]', space=smem, size = 0x4, offset = 0x4, fixed_abs, tag = 'smem constant byte address 0x4 - core index']
  #allocation1 [shape = 'u32[144,128]{1,0:T(1,128)}', space=vmem, size = 0x12000, scoped, tag = 'internal scratch']
  %s0 = inlined_call_operand.hbm [shape: bf16[16,128], index: 0, kind: input, shape index: {}]
  %s1 = inlined_call_operand.hbm [shape: bf16[128,128], index: 1, kind: input, shape index: {}]
  %s2 = inlined_call_operand.vmem [shape: f32[1,128], index: 2, kind: input, shape index: {}]
  %s3 = inlined_call_operand.hbm [shape: bf16[128,128], index: 3, kind: input, shape index: {}]
  %s4 = inlined_call_operand.vmem [shape: f32[1,128], index: 4, kind: input, shape index: {}]
  %s5 = inlined_call_operand.hbm [shape: bf16[128,128], index: 5, kind: input, shape index: {}]
  %s6 = inlined_call_operand.vmem [shape: f32[1,128], index: 6, kind: input, shape index: {}]
  %s7 = inlined_call_operand.hbm [shape: bf16[128,128], index: 7, kind: input, shape index: {}]
  %s8 = inlined_call_operand.vmem [shape: f32[1,128], index: 8, kind: input, shape index: {}]
  %s9 = inlined_call_operand.hbm [shape: bf16[16,128], index: 9, kind: output, shape index: {}]
  %s10 = sld [smem:[#allocation0]]
  $region66: #{tpu_custom_call.1} parent=0
    _
  %s12 = ssub.s32 1, %s10
  %s13 = scalar_select 0, %s12, %s10
  $region1: #{tpu_custom_call.1} parent=0
    #allocation2 [shape = 'u8[4096]{0}', space=vmem, size = 0x1000, scoped, tag = 'input window, operand 0, single buffered']
    #allocation3 [shape = 's32[1]{0}', space=sflag, size = 0x4, scoped, tag = 'scoped memory for tpu_custom_call.1']
    #allocation4 [shape = 's32[1]{0}', space=sflag, size = 0x4, scoped, tag = 'scoped memory for tpu_custom_call.1']
    #allocation5 [shape = 'u8[32768]{0}', space=vmem, size = 0x8000, scoped, tag = 'input window, operand 1, single buffered']
    #allocation6 [shape = 's32[1]{0}', space=sflag, size = 0x4, scoped, tag = 'scoped memory for tpu_custom_call.1']
    #allocation7 [shape = 'u8[32768]{0}', space=vmem, size = 0x8000, scoped, tag = 'input window, operand 3, single buffered']
    #allocation8 [shape = 'u8[32768]{0}', space=vmem, size = 0x8000, scoped, tag = 'input window, operand 5, single buffered']
    #allocation9 [shape = 's32[1]{0}', space=sflag, size = 0x4, scoped, tag = 'scoped memory for tpu_custom_call.1']
    #allocation10 [shape = 'u8[32768]{0}', space=vmem, size = 0x8000, scoped, tag = 'input window, operand 7, single buffered']
    #allocation11 [shape = 'u8[4096]{0}', space=vmem, size = 0x1000, scoped, tag = 'output window, operand 0, single buffered']
    %14 = vsyncpa [#allocation3], 0
    %15 = vsyncpa [#allocation6], 0
    %16 = vsyncpa [#allocation9], 0
    %17 = vsyncpa [#allocation4], 0
    // Predicated region
    $region2: #{tpu_custom_call.1} parent=1 // pred_check
      _
    $region3: #{tpu_custom_call.1} parent=1 // pred_check_branch
      %19 = sbr.rel (0) target = $region5
    $region4: #{tpu_custom_call.1} parent=1 // pred_region
      %s21 = ssub.s32 128, 128
      %22 = vsyncadd [#allocation3], %s21
      %s23 = sshll.u32 [#allocation2], 4
      %s24 = int_to_ptr.vmem [resolvable:$true] %s23
      %29 = dma.hbm_to_vmem [thread:$0]  %s0, 128, %s24, [#allocation3], 64, 64, 4
    $region5: #{tpu_custom_call.1} parent=1 // pred_fallthru
      _
    // Predicated region
    $region6: #{tpu_custom_call.1} parent=1 // pred_check
      _
    $region7: #{tpu_custom_call.1} parent=1 // pred_check_branch
      %31 = sbr.rel (0) target = $region9
    $region8: #{tpu_custom_call.1} parent=1 // pred_region
      %s33 = ssub.s32 1024, 1024
      %34 = vsyncadd [#allocation6], %s33
      %s35 = sshll.u32 [#allocation5], 4
      %s36 = int_to_ptr.vmem [resolvable:$true] %s35
      %41 = dma.hbm_to_vmem [thread:$0]  %s1, 1024, %s36, [#allocation6], 64, 64, 4
    $region9: #{tpu_custom_call.1} parent=1 // pred_fallthru
      _
    // Predicated region
    $region10: #{tpu_custom_call.1} parent=1 // pred_check
      _
    $region11: #{tpu_custom_call.1} parent=1 // pred_check_branch
      %43 = sbr.rel (0) target = $region13
    $region12: #{tpu_custom_call.1} parent=1 // pred_region
      _
    $region13: #{tpu_custom_call.1} parent=1 // pred_fallthru
      _
    // Predicated region
    $region14: #{tpu_custom_call.1} parent=1 // pred_check
      _
    $region15: #{tpu_custom_call.1} parent=1 // pred_check_branch
      %45 = sbr.rel (0) target = $region17
    $region16: #{tpu_custom_call.1} parent=1 // pred_region
      %s47 = ssub.s32 1024, 1024
      %48 = vsyncadd [#allocation6], %s47
      %s49 = sshll.u32 [#allocation7], 4
      %s50 = int_to_ptr.vmem [resolvable:$true] %s49
      %55 = dma.hbm_to_vmem [thread:$0]  %s3, 1024, %s50, [#allocation6], 64, 64, 4
    $region17: #{tpu_custom_call.1} parent=1 // pred_fallthru
      _
    // Predicated region
    $region18: #{tpu_custom_call.1} parent=1 // pred_check
      _
    $region19: #{tpu_custom_call.1} parent=1 // pred_check_branch
      %57 = sbr.rel (0) target = $region21
    $region20: #{tpu_custom_call.1} parent=1 // pred_region
      _
    $region21: #{tpu_custom_call.1} parent=1 // pred_fallthru
      _
    // Predicated region
    $region22: #{tpu_custom_call.1} parent=1 // pred_check
      _
    $region23: #{tpu_custom_call.1} parent=1 // pred_check_branch
      %59 = sbr.rel (0) target = $region25
    $region24: #{tpu_custom_call.1} parent=1 // pred_region
      %s61 = ssub.s32 1024, 1024
      %62 = vsyncadd [#allocation9], %s61
      %s63 = sshll.u32 [#allocation8], 4
      %s64 = int_to_ptr.vmem [resolvable:$true] %s63
      %69 = dma.hbm_to_vmem [thread:$0]  %s5, 1024, %s64, [#allocation9], 64, 64, 4
    $region25: #{tpu_custom_call.1} parent=1 // pred_fallthru
      _
    // Predicated region
    $region26: #{tpu_custom_call.1} parent=1 // pred_check
      _
    $region27: #{tpu_custom_call.1} parent=1 // pred_check_branch
      %71 = sbr.rel (0) target = $region29
    $region28: #{tpu_custom_call.1} parent=1 // pred_region
      _
    $region29: #{tpu_custom_call.1} parent=1 // pred_fallthru
      _
    // Predicated region
    $region30: #{tpu_custom_call.1} parent=1 // pred_check
      _
    $region31: #{tpu_custom_call.1} parent=1 // pred_check_branch
      %73 = sbr.rel (0) target = $region33
    $region32: #{tpu_custom_call.1} parent=1 // pred_region
      %s75 = ssub.s32 1024, 1024
      %76 = vsyncadd [#allocation9], %s75
      %s77 = sshll.u32 [#allocation10], 4
      %s78 = int_to_ptr.vmem [resolvable:$true] %s77
      %83 = dma.hbm_to_vmem [thread:$0]  %s7, 1024, %s78, [#allocation9], 64, 64, 4
    $region33: #{tpu_custom_call.1} parent=1 // pred_fallthru
      _
    // Predicated region
    $region34: #{tpu_custom_call.1} parent=1 // pred_check
      _
    $region35: #{tpu_custom_call.1} parent=1 // pred_check_branch
      %85 = sbr.rel (0) target = $region37
    $region36: #{tpu_custom_call.1} parent=1 // pred_region
      _
    $region37: #{tpu_custom_call.1} parent=1 // pred_fallthru
      _
    // Predicated region
    $region38: #{tpu_custom_call.1} parent=1 // pred_check
      _
    $region39: #{tpu_custom_call.1} parent=1 // pred_check_branch
      %87 = sbr.rel (0) target = $region41
    $region40: #{tpu_custom_call.1} parent=1 // pred_region
      %88 = dma.done [#allocation3], 128
    $region41: #{tpu_custom_call.1} parent=1 // pred_fallthru
      _
    // Predicated region
    $region42: #{tpu_custom_call.1} parent=1 // pred_check
      _
    $region43: #{tpu_custom_call.1} parent=1 // pred_check_branch
      %90 = sbr.rel (0) target = $region45
    $region44: #{tpu_custom_call.1} parent=1 // pred_region
      %91 = dma.done [#allocation6], 1024
    $region45: #{tpu_custom_call.1} parent=1 // pred_fallthru
      _
    // Predicated region
    $region46: #{tpu_custom_call.1} parent=1 // pred_check
      _
    $region47: #{tpu_custom_call.1} parent=1 // pred_check_branch
      %93 = sbr.rel (0) target = $region49
    $region48: #{tpu_custom_call.1} parent=1 // pred_region
      %94 = dma.done [#allocation6], 1024
    $region49: #{tpu_custom_call.1} parent=1 // pred_fallthru
      _
    // Predicated region
    $region50: #{tpu_custom_call.1} parent=1 // pred_check
      _
    $region51: #{tpu_custom_call.1} parent=1 // pred_check_branch
      %96 = sbr.rel (0) target = $region53
    $region52: #{tpu_custom_call.1} parent=1 // pred_region
      %97 = dma.done [#allocation9], 1024
    $region53: #{tpu_custom_call.1} parent=1 // pred_fallthru
      _
    // Predicated region
    $region54: #{tpu_custom_call.1} parent=1 // pred_check
      _
    $region55: #{tpu_custom_call.1} parent=1 // pred_check_branch
      %99 = sbr.rel (0) target = $region57
    $region56: #{tpu_custom_call.1} parent=1 // pred_region
      %100 = dma.done [#allocation9], 1024
    $region57: #{tpu_custom_call.1} parent=1 // pred_fallthru
      _
    %v102 = vld [vmem:[#allocation2] sm:$0xf]
    %v103 = vld [vmem:[#allocation2 + $0x4] sm:$0xf]
    %v104 = vld [vmem:[#allocation5] sm:$0xf]
    %v105 = vld [vmem:[#allocation5 + $0x4] sm:$0xf]
    %v106 = vld [vmem:[#allocation5 + $0x8] sm:$0xf]
    %v107 = vld [vmem:[#allocation5 + $0xc] sm:$0xf]
    %v108 = vld [vmem:[#allocation5 + $0x10] sm:$0xf]
    %v109 = vld [vmem:[#allocation5 + $0x14] sm:$0xf]
    %v110 = vld [vmem:[#allocation5 + $0x18] sm:$0xf]
    %v111 = vld [vmem:[#allocation5 + $0x1c] sm:$0xf]
    %v112 = vld [vmem:[#allocation5 + $0x20] sm:$0xf]
    %v113 = vld [vmem:[#allocation5 + $0x24] sm:$0xf]
    %v114 = vld [vmem:[#allocation5 + $0x28] sm:$0xf]
    %v115 = vld [vmem:[#allocation5 + $0x2c] sm:$0xf]
    %v116 = vld [vmem:[#allocation5 + $0x30] sm:$0xf]
    %v117 = vld [vmem:[#allocation5 + $0x34] sm:$0xf]
    %v118 = vld [vmem:[#allocation5 + $0x38] sm:$0xf]
    %v119 = vld [vmem:[#allocation5 + $0x3c] sm:$0xf]
    %v120 = vld [vmem:[%s2] sm:$0x1]
    %v122 = vlaneseq
    %v123 = vshrl.u32 %v122, 7
    %v124 = vsub.s32 0, %v123
    %v125 = vrot.slane %v120, %v124
    %v129 = vunpack.c.l.b16 %v102
    %v130 = vunpack.c.l.b16 %v103
    %v131 = vpack.c.b16 %v130, %v129
    %v149 = vunpack.c.l.b16 %v104
    %v150 = vunpack.c.l.b16 %v105
    %v151 = vunpack.c.l.b16 %v106
    %v152 = vunpack.c.l.b16 %v107
    %v153 = vunpack.c.l.b16 %v108
    %v154 = vunpack.c.l.b16 %v109
    %v155 = vunpack.c.l.b16 %v110
    %v156 = vunpack.c.l.b16 %v111
    %v157 = vunpack.c.l.b16 %v112
    %v158 = vunpack.c.l.b16 %v113
    %v159 = vunpack.c.l.b16 %v114
    %v160 = vunpack.c.l.b16 %v115
    %v161 = vunpack.c.l.b16 %v116
    %v162 = vunpack.c.l.b16 %v117
    %v163 = vunpack.c.l.b16 %v118
    %v164 = vunpack.c.l.b16 %v119
    %v165 = vpack.c.b16 %v150, %v149
    %v166 = vpack.c.b16 %v152, %v151
    %v167 = vpack.c.b16 %v154, %v153
    %v168 = vpack.c.b16 %v156, %v155
    %v169 = vpack.c.b16 %v158, %v157
    %v170 = vpack.c.b16 %v160, %v159
    %v171 = vpack.c.b16 %v162, %v161
    %v172 = vpack.c.b16 %v164, %v163
    %181 = vmatprep.subr.bf16.mxu0 0
    %182 = vmatpush1.bf16.msra.mxu0 %v165
    %183 = vmatprep.subr.bf16.mxu0 0
    %184 = vmatpush1.bf16.msra.mxu0 %v166
    %185 = vmatprep.subr.bf16.mxu0 0
    %186 = vmatpush1.bf16.msra.mxu0 %v167
    %187 = vmatprep.subr.bf16.mxu0 0
    %188 = vmatpush1.bf16.msra.mxu0 %v168
    %189 = vmatprep.subr.bf16.mxu0 0
    %190 = vmatpush1.bf16.msra.mxu0 %v169
    %191 = vmatprep.subr.bf16.mxu0 0
    %192 = vmatpush1.bf16.msra.mxu0 %v170
    %193 = vmatprep.subr.bf16.mxu0 0
    %194 = vmatpush1.bf16.msra.mxu0 %v171
    %195 = vmatprep.subr.bf16.mxu0 0
    %196 = vmatpush1.bf16.msra.mxu0 %v172
    %197 = vmatprep.subr.bf16.mxu0 0
    %198 = vmatpush1.bf16.msra.mxu0 0
    %199 = vmatprep.subr.bf16.mxu0 0
    %200 = vmatpush1.bf16.msra.mxu0 0
    %201 = vmatprep.subr.bf16.mxu0 0
    %202 = vmatpush1.bf16.msra.mxu0 0
    %203 = vmatprep.subr.bf16.mxu0 0
    %204 = vmatpush1.bf16.msra.mxu0 0
    %205 = vmatprep.subr.bf16.mxu0 0
    %206 = vmatpush1.bf16.msra.mxu0 0
    %207 = vmatprep.subr.bf16.mxu0 0
    %208 = vmatpush1.bf16.msra.mxu0 0
    %209 = vmatprep.subr.bf16.mxu0 0
    %210 = vmatpush1.bf16.msra.mxu0 0
    %211 = vmatprep.subr.bf16.mxu0 0
    %212 = vmatpush1.bf16.msra.mxu0 0
    %213 = vmatprep.mubr.bf16.mxu0 0
    %214 = vmatmul.mubr.bf16.gmra.mrb[0].mxu0 %v131
    %v215 = vpop.f32.mrb[0].mxu0
    %v216 = vadd.f32 %v125, %v215
    %v217 = vpop.f32.mrb[0].mxu0
    %v218 = vpop.f32.mrb[0].mxu0
    %v219 = vadd.f32 %v125, %v218
    %v220 = vpop.f32.mrb[0].mxu0
    %221 = vdwg.mxu0
    %v222 = vmax.f32 %v216, 0.0
    %v223 = vmax.f32 %v219, 0.0
    %v224 = vpack.c.bf16 %v223, %v222
    %v225 = vld [vmem:[#allocation7] sm:$0xf]
    %v226 = vld [vmem:[#allocation7 + $0x4] sm:$0xf]
    %v227 = vld [vmem:[#allocation7 + $0x8] sm:$0xf]
    %v228 = vld [vmem:[#allocation7 + $0xc] sm:$0xf]
    %v229 = vld [vmem:[#allocation7 + $0x10] sm:$0xf]
    %v230 = vld [vmem:[#allocation7 + $0x14] sm:$0xf]
    %v231 = vld [vmem:[#allocation7 + $0x18] sm:$0xf]
    %v232 = vld [vmem:[#allocation7 + $0x1c] sm:$0xf]
    %v233 = vld [vmem:[#allocation7 + $0x20] sm:$0xf]
    %v234 = vld [vmem:[#allocation7 + $0x24] sm:$0xf]
    %v235 = vld [vmem:[#allocation7 + $0x28] sm:$0xf]
    %v236 = vld [vmem:[#allocation7 + $0x2c] sm:$0xf]
    %v237 = vld [vmem:[#allocation7 + $0x30] sm:$0xf]
    %v238 = vld [vmem:[#allocation7 + $0x34] sm:$0xf]
    %v239 = vld [vmem:[#allocation7 + $0x38] sm:$0xf]
    %v240 = vld [vmem:[#allocation7 + $0x3c] sm:$0xf]
    %v241 = vld [vmem:[%s4] sm:$0x1]
    %v243 = vlaneseq
    %v244 = vshrl.u32 %v243, 7
    %v245 = vsub.s32 0, %v244
    %v246 = vrot.slane %v241, %v245
    %v264 = vunpack.c.l.b16 %v225
    %v265 = vunpack.c.l.b16 %v226
    %v266 = vunpack.c.l.b16 %v227
    %v267 = vunpack.c.l.b16 %v228
    %v268 = vunpack.c.l.b16 %v229
    %v269 = vunpack.c.l.b16 %v230
    %v270 = vunpack.c.l.b16 %v231
    %v271 = vunpack.c.l.b16 %v232
    %v272 = vunpack.c.l.b16 %v233
    %v273 = vunpack.c.l.b16 %v234
    %v274 = vunpack.c.l.b16 %v235
    %v275 = vunpack.c.l.b16 %v236
    %v276 = vunpack.c.l.b16 %v237
    %v277 = vunpack.c.l.b16 %v238
    %v278 = vunpack.c.l.b16 %v239
    %v279 = vunpack.c.l.b16 %v240
    %v280 = vpack.c.b16 %v265, %v264
    %v281 = vpack.c.b16 %v267, %v266
    %v282 = vpack.c.b16 %v269, %v268
    %v283 = vpack.c.b16 %v271, %v270
    %v284 = vpack.c.b16 %v273, %v272
    %v285 = vpack.c.b16 %v275, %v274
    %v286 = vpack.c.b16 %v277, %v276
    %v287 = vpack.c.b16 %v279, %v278
    %296 = vmatprep.subr.bf16.mxu0 0
    %297 = vmatpush1.bf16.msra.mxu0 %v280
    %298 = vmatprep.subr.bf16.mxu0 0
    %299 = vmatpush1.bf16.msra.mxu0 %v281
    %300 = vmatprep.subr.bf16.mxu0 0
    %301 = vmatpush1.bf16.msra.mxu0 %v282
    %302 = vmatprep.subr.bf16.mxu0 0
    %303 = vmatpush1.bf16.msra.mxu0 %v283
    %304 = vmatprep.subr.bf16.mxu0 0
    %305 = vmatpush1.bf16.msra.mxu0 %v284
    %306 = vmatprep.subr.bf16.mxu0 0
    %307 = vmatpush1.bf16.msra.mxu0 %v285
    %308 = vmatprep.subr.bf16.mxu0 0
    %309 = vmatpush1.bf16.msra.mxu0 %v286
    %310 = vmatprep.subr.bf16.mxu0 0
    %311 = vmatpush1.bf16.msra.mxu0 %v287
    %312 = vmatprep.subr.bf16.mxu0 0
    %313 = vmatpush1.bf16.msra.mxu0 0
    %314 = vmatprep.subr.bf16.mxu0 0
    %315 = vmatpush1.bf16.msra.mxu0 0
    %316 = vmatprep.subr.bf16.mxu0 0
    %317 = vmatpush1.bf16.msra.mxu0 0
    %318 = vmatprep.subr.bf16.mxu0 0
    %319 = vmatpush1.bf16.msra.mxu0 0
    %320 = vmatprep.subr.bf16.mxu0 0
    %321 = vmatpush1.bf16.msra.mxu0 0
    %322 = vmatprep.subr.bf16.mxu0 0
    %323 = vmatpush1.bf16.msra.mxu0 0
    %324 = vmatprep.subr.bf16.mxu0 0
    %325 = vmatpush1.bf16.msra.mxu0 0
    %326 = vmatprep.subr.bf16.mxu0 0
    %327 = vmatpush1.bf16.msra.mxu0 0
    %328 = vmatprep.mubr.bf16.mxu0 0
    %329 = vmatmul.mubr.bf16.gmra.mrb[0].mxu0 %v224
    %v330 = vpop.f32.mrb[0].mxu0
    %v331 = vadd.f32 %v246, %v330
    %v332 = vpop.f32.mrb[0].mxu0
    %v333 = vpop.f32.mrb[0].mxu0
    %v334 = vadd.f32 %v246, %v333
    %v335 = vpop.f32.mrb[0].mxu0
    %336 = vdwg.mxu0
    %v337 = vmax.f32 %v331, 0.0
    %v338 = vmax.f32 %v334, 0.0
    %v339 = vpack.c.bf16 %v338, %v337
    %v340 = vld [vmem:[#allocation8] sm:$0xf]
    %v341 = vld [vmem:[#allocation8 + $0x4] sm:$0xf]
    %v342 = vld [vmem:[#allocation8 + $0x8] sm:$0xf]
    %v343 = vld [vmem:[#allocation8 + $0xc] sm:$0xf]
    %v344 = vld [vmem:[#allocation8 + $0x10] sm:$0xf]
    %v345 = vld [vmem:[#allocation8 + $0x14] sm:$0xf]
    %v346 = vld [vmem:[#allocation8 + $0x18] sm:$0xf]
    %v347 = vld [vmem:[#allocation8 + $0x1c] sm:$0xf]
    %v348 = vld [vmem:[#allocation8 + $0x20] sm:$0xf]
    %v349 = vld [vmem:[#allocation8 + $0x24] sm:$0xf]
    %v350 = vld [vmem:[#allocation8 + $0x28] sm:$0xf]
    %v351 = vld [vmem:[#allocation8 + $0x2c] sm:$0xf]
    %v352 = vld [vmem:[#allocation8 + $0x30] sm:$0xf]
    %v353 = vld [vmem:[#allocation8 + $0x34] sm:$0xf]
    %v354 = vld [vmem:[#allocation8 + $0x38] sm:$0xf]
    %v355 = vld [vmem:[#allocation8 + $0x3c] sm:$0xf]
    %v356 = vld [vmem:[%s6] sm:$0x1]
    %v358 = vlaneseq
    %v359 = vshrl.u32 %v358, 7
    %v360 = vsub.s32 0, %v359
    %v361 = vrot.slane %v356, %v360
    %v379 = vunpack.c.l.b16 %v340
    %v380 = vunpack.c.l.b16 %v341
    %v381 = vunpack.c.l.b16 %v342
    %v382 = vunpack.c.l.b16 %v343
    %v383 = vunpack.c.l.b16 %v344
    %v384 = vunpack.c.l.b16 %v345
    %v385 = vunpack.c.l.b16 %v346
    %v386 = vunpack.c.l.b16 %v347
    %v387 = vunpack.c.l.b16 %v348
    %v388 = vunpack.c.l.b16 %v349
    %v389 = vunpack.c.l.b16 %v350
    %v390 = vunpack.c.l.b16 %v351
    %v391 = vunpack.c.l.b16 %v352
    %v392 = vunpack.c.l.b16 %v353
    %v393 = vunpack.c.l.b16 %v354
    %v394 = vunpack.c.l.b16 %v355
    %v395 = vpack.c.b16 %v380, %v379
    %v396 = vpack.c.b16 %v382, %v381
    %v397 = vpack.c.b16 %v384, %v383
    %v398 = vpack.c.b16 %v386, %v385
    %v399 = vpack.c.b16 %v388, %v387
    %v400 = vpack.c.b16 %v390, %v389
    %v401 = vpack.c.b16 %v392, %v391
    %v402 = vpack.c.b16 %v394, %v393
    %411 = vmatprep.subr.bf16.mxu0 0
    %412 = vmatpush1.bf16.msra.mxu0 %v395
    %413 = vmatprep.subr.bf16.mxu0 0
    %414 = vmatpush1.bf16.msra.mxu0 %v396
    %415 = vmatprep.subr.bf16.mxu0 0
    %416 = vmatpush1.bf16.msra.mxu0 %v397
    %417 = vmatprep.subr.bf16.mxu0 0
    %418 = vmatpush1.bf16.msra.mxu0 %v398
    %419 = vmatprep.subr.bf16.mxu0 0
    %420 = vmatpush1.bf16.msra.mxu0 %v399
    %421 = vmatprep.subr.bf16.mxu0 0
    %422 = vmatpush1.bf16.msra.mxu0 %v400
    %423 = vmatprep.subr.bf16.mxu0 0
    %424 = vmatpush1.bf16.msra.mxu0 %v401
    %425 = vmatprep.subr.bf16.mxu0 0
    %426 = vmatpush1.bf16.msra.mxu0 %v402
    %427 = vmatprep.subr.bf16.mxu0 0
    %428 = vmatpush1.bf16.msra.mxu0 0
    %429 = vmatprep.subr.bf16.mxu0 0
    %430 = vmatpush1.bf16.msra.mxu0 0
    %431 = vmatprep.subr.bf16.mxu0 0
    %432 = vmatpush1.bf16.msra.mxu0 0
    %433 = vmatprep.subr.bf16.mxu0 0
    %434 = vmatpush1.bf16.msra.mxu0 0
    %435 = vmatprep.subr.bf16.mxu0 0
    %436 = vmatpush1.bf16.msra.mxu0 0
    %437 = vmatprep.subr.bf16.mxu0 0
    %438 = vmatpush1.bf16.msra.mxu0 0
    %439 = vmatprep.subr.bf16.mxu0 0
    %440 = vmatpush1.bf16.msra.mxu0 0
    %441 = vmatprep.subr.bf16.mxu0 0
    %442 = vmatpush1.bf16.msra.mxu0 0
    %443 = vmatprep.mubr.bf16.mxu0 0
    %444 = vmatmul.mubr.bf16.gmra.mrb[0].mxu0 %v339
    %v445 = vpop.f32.mrb[0].mxu0
    %v446 = vadd.f32 %v361, %v445
    %v447 = vpop.f32.mrb[0].mxu0
    %v448 = vpop.f32.mrb[0].mxu0
    %v449 = vadd.f32 %v361, %v448
    %v450 = vpop.f32.mrb[0].mxu0
    %451 = vdwg.mxu0
    %v452 = vmax.f32 %v446, 0.0
    %v453 = vmax.f32 %v449, 0.0
    %v454 = vpack.c.bf16 %v453, %v452
    %v455 = vld [vmem:[#allocation10] sm:$0xf]
    %v456 = vld [vmem:[#allocation10 + $0x4] sm:$0xf]
    %v457 = vld [vmem:[#allocation10 + $0x8] sm:$0xf]
    %v458 = vld [vmem:[#allocation10 + $0xc] sm:$0xf]
    %v459 = vld [vmem:[#allocation10 + $0x10] sm:$0xf]
    %v460 = vld [vmem:[#allocation10 + $0x14] sm:$0xf]
    %v461 = vld [vmem:[#allocation10 + $0x18] sm:$0xf]
    %v462 = vld [vmem:[#allocation10 + $0x1c] sm:$0xf]
    %v463 = vld [vmem:[#allocation10 + $0x20] sm:$0xf]
    %v464 = vld [vmem:[#allocation10 + $0x24] sm:$0xf]
    %v465 = vld [vmem:[#allocation10 + $0x28] sm:$0xf]
    %v466 = vld [vmem:[#allocation10 + $0x2c] sm:$0xf]
    %v467 = vld [vmem:[#allocation10 + $0x30] sm:$0xf]
    %v468 = vld [vmem:[#allocation10 + $0x34] sm:$0xf]
    %v469 = vld [vmem:[#allocation10 + $0x38] sm:$0xf]
    %v470 = vld [vmem:[#allocation10 + $0x3c] sm:$0xf]
    %v471 = vld [vmem:[%s8] sm:$0x1]
    %v473 = vlaneseq
    %v474 = vshrl.u32 %v473, 7
    %v475 = vsub.s32 0, %v474
    %v476 = vrot.slane %v471, %v475
    %v494 = vunpack.c.l.b16 %v455
    %v495 = vunpack.c.l.b16 %v456
    %v496 = vunpack.c.l.b16 %v457
    %v497 = vunpack.c.l.b16 %v458
    %v498 = vunpack.c.l.b16 %v459
    %v499 = vunpack.c.l.b16 %v460
    %v500 = vunpack.c.l.b16 %v461
    %v501 = vunpack.c.l.b16 %v462
    %v502 = vunpack.c.l.b16 %v463
    %v503 = vunpack.c.l.b16 %v464
    %v504 = vunpack.c.l.b16 %v465
    %v505 = vunpack.c.l.b16 %v466
    %v506 = vunpack.c.l.b16 %v467
    %v507 = vunpack.c.l.b16 %v468
    %v508 = vunpack.c.l.b16 %v469
    %v509 = vunpack.c.l.b16 %v470
    %v510 = vpack.c.b16 %v495, %v494
    %v511 = vpack.c.b16 %v497, %v496
    %v512 = vpack.c.b16 %v499, %v498
    %v513 = vpack.c.b16 %v501, %v500
    %v514 = vpack.c.b16 %v503, %v502
    %v515 = vpack.c.b16 %v505, %v504
    %v516 = vpack.c.b16 %v507, %v506
    %v517 = vpack.c.b16 %v509, %v508
    %526 = vmatprep.subr.bf16.mxu0 0
    %527 = vmatpush1.bf16.msra.mxu0 %v510
    %528 = vmatprep.subr.bf16.mxu0 0
    %529 = vmatpush1.bf16.msra.mxu0 %v511
    %530 = vmatprep.subr.bf16.mxu0 0
    %531 = vmatpush1.bf16.msra.mxu0 %v512
    %532 = vmatprep.subr.bf16.mxu0 0
    %533 = vmatpush1.bf16.msra.mxu0 %v513
    %534 = vmatprep.subr.bf16.mxu0 0
    %535 = vmatpush1.bf16.msra.mxu0 %v514
    %536 = vmatprep.subr.bf16.mxu0 0
    %537 = vmatpush1.bf16.msra.mxu0 %v515
    %538 = vmatprep.subr.bf16.mxu0 0
    %539 = vmatpush1.bf16.msra.mxu0 %v516
    %540 = vmatprep.subr.bf16.mxu0 0
    %541 = vmatpush1.bf16.msra.mxu0 %v517
    %542 = vmatprep.subr.bf16.mxu0 0
    %543 = vmatpush1.bf16.msra.mxu0 0
    %544 = vmatprep.subr.bf16.mxu0 0
    %545 = vmatpush1.bf16.msra.mxu0 0
    %546 = vmatprep.subr.bf16.mxu0 0
    %547 = vmatpush1.bf16.msra.mxu0 0
    %548 = vmatprep.subr.bf16.mxu0 0
    %549 = vmatpush1.bf16.msra.mxu0 0
    %550 = vmatprep.subr.bf16.mxu0 0
    %551 = vmatpush1.bf16.msra.mxu0 0
    %552 = vmatprep.subr.bf16.mxu0 0
    %553 = vmatpush1.bf16.msra.mxu0 0
    %554 = vmatprep.subr.bf16.mxu0 0
    %555 = vmatpush1.bf16.msra.mxu0 0
    %556 = vmatprep.subr.bf16.mxu0 0
    %557 = vmatpush1.bf16.msra.mxu0 0
    %558 = vmatprep.mubr.bf16.mxu0 0
    %559 = vmatmul.mubr.bf16.gmra.mrb[0].mxu0 %v454
    %v560 = vpop.f32.mrb[0].mxu0
    %v561 = vadd.f32 %v476, %v560
    %v562 = vpop.f32.mrb[0].mxu0
    %v563 = vpop.f32.mrb[0].mxu0
    %v564 = vadd.f32 %v476, %v563
    %v565 = vpop.f32.mrb[0].mxu0
    %566 = vdwg.mxu0
    %v567 = vpack.c.bf16 %v564, %v561
    %v569 = vunpack.c.l.b16 %v567
    %v570 = vunpack.c.h.b16 %v567
    %v571 = vpack.c.b16 %v569, %v569
    %v572 = vpack.c.b16 %v570, %v570
    %575 = vst [vmem:[#allocation11] sm:$0xf] %v571
    %576 = vst [vmem:[#allocation11 + $0x4] sm:$0xf] %v572
    // Predicated region
    $region58: #{tpu_custom_call.1} parent=1 // pred_check
      _
    $region59: #{tpu_custom_call.1} parent=1 // pred_check_branch
      %578 = sbr.rel (0) target = $region61
    $region60: #{tpu_custom_call.1} parent=1 // pred_region
      %s580 = ssub.s32 128, 128
      %581 = vsyncadd [#allocation4], %s580
      %s582 = sshll.u32 [#allocation11], 4
      %s583 = int_to_ptr.vmem [resolvable:$true] %s582
      %588 = dma.vmem_to_hbm [thread:$0]  %s583, 128, %s9, [#allocation4], 64, 64, 4
    $region61: #{tpu_custom_call.1} parent=1 // pred_fallthru
      _
    // Predicated region
    $region62: #{tpu_custom_call.1} parent=1 // pred_check
      _
    $region63: #{tpu_custom_call.1} parent=1 // pred_check_branch
      %590 = sbr.rel (0) target = $region65
    $region64: #{tpu_custom_call.1} parent=1 // pred_region
      %591 = dma.done [#allocation4], 128
    $region65: #{tpu_custom_call.1} parent=1 // pred_fallthru
      _
    %592 = vsyncpa [#allocation3], 1
    %593 = vsyncpa [#allocation6], 1
    %594 = vsyncpa [#allocation9], 1
    %595 = vsyncpa [#allocation4], 1

</llo_original>
